<compile_context>
chip_gen: v7x
topology: tpu7x:2x2x1
jax: 0.10.0
libtpu: 0.0.40
codegen_flags: <defaults>
</compile_context>

<pallas_src>
import functools

import numpy as np
import jax
import jax.numpy as jnp
from jax.experimental import pallas as pl
from jax.experimental.pallas import tpu as pltpu


def _round_up(x, m):
    return ((x + m - 1) // m) * m


def _cdiv(a, b):
    return (a + b - 1) // b


# ----------------------------------------------------------------------------
# Pallas kernel: fused (downsample+QoI folded) matmul + MLP + blend
# ----------------------------------------------------------------------------
def _hybrid_alpha_kernel(wsig_ref,   # SMEM (1, 1) f32      blend weight = sigmoid(raw_w)
                         x_ref,      # VMEM (TB, N)         alpha_highres tile (compute dtype)
                         wx_ref,     # VMEM (N, Q_pad + H)  [A_ds | W1^T]   (compute dtype)
                         b1_ref,     # VMEM (1, H) f32
                         ann_ref,    # VMEM (H, Q_pad)      W2^T diag(f) Q^T (compute dtype)
                         c_ref,      # VMEM (1, Q_pad) f32  (b2*f) Q^T
                         out_ref,    # VMEM (TB, Q_pad)
                         *, q_pad):
    w = wsig_ref[0, 0]                                  # scalar blend, hoisted sigmoid

    # Single MXU pass over the shared LHS x for both branches; f32 accumulation.
    xw = jnp.dot(x_ref[...], wx_ref[...], preferred_element_type=jnp.float32)

    ds = xw[:, :q_pad]                                  # downsample (+QoI folded) branch
    h = jnp.tanh(xw[:, q_pad:] + b1_ref[...])           # hidden activations, f32 epilogue
    nn = jnp.dot(h.astype(ann_ref.dtype), ann_ref[...],
                 preferred_element_type=jnp.float32) + c_ref[...]

    # Blend: w*ds + (1-w)*nn, written as nn + w*(ds - nn) (one fewer VPU mul).
    out_ref[...] = (nn + w * (ds - nn)).astype(out_ref.dtype)


def hybrid_alpha_forward(alpha_highres, params):
    """Fused forward pass.  Compute/stream dtype follows alpha_highres.dtype."""
    if alpha_highres.ndim == 1:
        alpha_highres = alpha_highres[None, :]
    B, n_in = alpha_highres.shape
    n_qoi = params["n_qoi"]
    hidden = params["hidden"]
    q_pad = params["q_pad"]

    cdt = alpha_highres.dtype                       # f32 or bf16 streaming
    wx = params["wx"].astype(cdt)                   # (n_in, q_pad + hidden)
    ann = params["a_nn"].astype(cdt)                # (hidden, q_pad)
    b1 = params["b1"]                               # f32 (1, hidden)
    c = params["c"]                                 # f32 (1, q_pad)
    wsig = jax.nn.sigmoid(params["raw_w"]).astype(jnp.float32).reshape(1, 1)

    # ---- batch tile: big enough to beat the ~0.35us grid-step overhead,
    #      and >= 2 grid steps for large B so both v7x TCs get work.
    TB_MAX = 1024
    if B <= 16:
        TB = B                                      # full-dim block (legal for any B)
    elif B <= 2 * TB_MAX:
        TB = min(TB_MAX, _round_up(_cdiv(B, 2), 16))
    else:
        TB = TB_MAX
    grid = (_cdiv(B, TB),)                          # partial last tile handled by Pallas

    n_wx = q_pad + hidden
    itm = jnp.dtype(cdt).itemsize
    weight_bytes = (n_in * n_wx + hidden * q_pad) * itm + (hidden + q_pad) * 4
    flops = 2 * B * (n_in * n_wx + hidden * q_pad)
    bytes_accessed = int((B * n_in + B * q_pad) * itm + weight_bytes + 4)

    # VMEM budget: double-buffered x/out tiles + (double-buffered) weights + headroom.
    vmem_bytes = 2 * TB * (n_in + q_pad) * itm + 2 * weight_bytes
    vmem_limit = int(min(32 << 20, max(4 * vmem_bytes, 16 << 20)))

    kernel = functools.partial(_hybrid_alpha_kernel, q_pad=q_pad)

    out_padded = pl.pallas_call(
        kernel,
        out_shape=jax.ShapeDtypeStruct((B, q_pad), cdt),
        grid=grid,
        in_specs=[
            pl.BlockSpec(memory_space=pltpu.MemorySpace.SMEM),   # blend scalar
            pl.BlockSpec((TB, n_in), lambda i: (i, 0)),          # x tile (streamed)
            pl.BlockSpec((n_in, n_wx), lambda i: (0, 0)),        # [A_ds | W1^T] (resident)
            pl.BlockSpec((1, hidden), lambda i: (0, 0)),         # b1
            pl.BlockSpec((hidden, q_pad), lambda i: (0, 0)),     # A_nn (resident)
            pl.BlockSpec((1, q_pad), lambda i: (0, 0)),          # c
        ],
        out_specs=pl.BlockSpec((TB, q_pad), lambda i: (i, 0)),
        compiler_params=pltpu.CompilerParams(
            dimension_semantics=("parallel",),       # shard batch across TCs on v7x
            vmem_limit_bytes=vmem_limit),
        cost_estimate=pl.CostEstimate(
            flops=flops,
            transcendentals=B * hidden,
            bytes_accessed=bytes_accessed),
    )(wsig, alpha_highres, wx, b1, ann, c)

    # Strip the lane padding of the qoi dim.
    return out_padded[:, :n_qoi]


# ----------------------------------------------------------------------------
# Deterministic parameter construction (plain numpy/JAX glue, offline folding)
# ----------------------------------------------------------------------------
def interp_matrix(x_out, x_in):
    """(len(x_out), len(x_in)) matrix M s.t. M @ y == linear-interp of y."""
    x_out = np.asarray(x_out, np.float64)
    x_in = np.asarray(x_in, np.float64)
    idx = np.searchsorted(x_in, x_out, side="right") - 1
    idx = np.clip(idx, 0, len(x_in) - 2)
    x0, x1 = x_in[idx], x_in[idx + 1]
    t = (x_out - x0) / (x1 - x0)
    M = np.zeros((len(x_out), len(x_in)), dtype=np.float32)
    rows = np.arange(len(x_out))
    M[rows, idx] = (1.0 - t).astype(np.float32)
    M[rows, idx + 1] = t.astype(np.float32)
    return M


def make_params(input_length, downsample_factor, hidden, qoi_points):
    n_out = input_length // downsample_factor + 1
    n_qoi = len(qoi_points)
    q_pad = _round_up(n_qoi, 128)                 # lane-dense output dim

    x_hi = np.linspace(0.0, 1.0, input_length)
    x_lo = np.linspace(0.0, 1.0, n_out)
    D = interp_matrix(x_lo, x_hi)                     # (n_out, N_in)
    Q = interp_matrix(np.asarray(qoi_points), x_lo)   # (n_qoi, n_out)
    f = np.ones((n_out,), np.float32)                 # AlphaLayer forcing (ones)

    key = jax.random.PRNGKey(42)
    k1, k2, k3, k4 = jax.random.split(key, 4)
    w1 = np.asarray(jax.random.normal(k1, (hidden, input_length), jnp.float32)) * 0.1
    b1 = np.asarray(jax.random.normal(k2, (hidden,), jnp.float32)) * 0.01
    w2 = np.asarray(jax.random.normal(k3, (n_out, hidden), jnp.float32)) * 0.1
    b2 = np.asarray(jax.random.normal(k4, (n_out,), jnp.float32)) * 0.01

    # --- offline folding of forcing + QoI into upstream weights ---
    fQ = (f[:, None] * Q.T).astype(np.float32)        # diag(f) @ Q^T  (n_out, n_qoi)
    A_ds = (D.T @ fQ).astype(np.float32)              # (N_in, n_qoi)
    A_nn = (w2.T @ fQ).astype(np.float32)             # (H, n_qoi)
    c = (b2 @ fQ).astype(np.float32)                  # (n_qoi,)

    # Only the output/lane dim is padded to 128; contraction dims N, H stay raw.
    a_ds_p = np.zeros((input_length, q_pad), np.float32)
    a_ds_p[:, :n_qoi] = A_ds
    a_nn_p = np.zeros((hidden, q_pad), np.float32)
    a_nn_p[:, :n_qoi] = A_nn
    c_p = np.zeros((1, q_pad), np.float32)
    c_p[0, :n_qoi] = c

    # Fuse the two matmuls that share LHS x: one MXU pass over [A_ds | W1^T].
    wx = np.concatenate([a_ds_p, w1.T.astype(np.float32)], axis=1)  # (N_in, q_pad+H)

    return {
        "raw_w": jnp.asarray(0.5, jnp.float32),
        "wx": jnp.asarray(wx),
        "b1": jnp.asarray(b1.reshape(1, hidden)),
        "a_nn": jnp.asarray(a_nn_p),
        "c": jnp.asarray(c_p),
        "n_qoi": n_qoi,
        "hidden": hidden,
        "q_pad": q_pad,
        # unpadded pieces kept only for the pure-JAX reference check
        "ref": {"D": D, "Q": Q, "f": f, "w1": w1, "b1": b1, "w2": w2, "b2": b2},
    }


if __name__ == "__main__":
    # Small shapes consistent with the module structure.
    INPUT_LENGTH = 16
    DOWNSAMPLE = 2
    HIDDEN = 32
    QOI_POINTS = [0.25, 0.5, 0.75]
    BATCH = 2

    params = make_params(INPUT_LENGTH, DOWNSAMPLE, HIDDEN, QOI_POINTS)

    key = jax.random.PRNGKey(0)
    alpha_highres = jax.random.normal(key, (BATCH, INPUT_LENGTH), jnp.float32)

    # Pure-JAX reference following the original (unfolded) module semantics.
    r = params["ref"]
    w = jax.nn.sigmoid(params["raw_w"])
    x = alpha_highres
    alpha_ds = x @ jnp.asarray(r["D"]).T
    h = jnp.tanh(x @ jnp.asarray(r["w1"]).T + jnp.asarray(r["b1"]))
    alpha_nn = h @ jnp.asarray(r["w2"]).T + jnp.asarray(r["b2"])
    alpha_tilde = w * alpha_ds + (1.0 - w) * alpha_nn
    u = alpha_tilde * jnp.asarray(r["f"])
    ref = np.asarray(u @ jnp.asarray(r["Q"]).T)

    # f32 streaming path (tight tolerance; folding only re-associates reductions).
    qoi_f32 = jax.block_until_ready(hybrid_alpha_forward(alpha_highres, params))
    assert qoi_f32.shape == (BATCH, len(QOI_POINTS))
    np.testing.assert_allclose(np.asarray(qoi_f32), ref, rtol=1e-5, atol=1e-5)

    # bf16 streaming path (v6e/v7x native MXU dtype, f32 accumulation) — looser tol.
    qoi_bf16 = jax.block_until_ready(
        hybrid_alpha_forward(alpha_highres.astype(jnp.bfloat16), params))
    assert qoi_bf16.shape == (BATCH, len(QOI_POINTS))
    np.testing.assert_allclose(np.asarray(qoi_bf16, np.float32), ref,
                               rtol=5e-2, atol=5e-2)

    print("KERNEL_OK")
</pallas_src>

<mosaic_0001>
module attributes {stable_mosaic.version = 11 : i64} {
  func.func @_hybrid_alpha_kernel(%arg0: i32, %arg1: memref<1x1xf32, #tpu.memory_space<smem>>, %arg2: memref<2x16xf32, #tpu.memory_space<vmem>>, %arg3: memref<16x160xf32, #tpu.memory_space<vmem>>, %arg4: memref<1x32xf32, #tpu.memory_space<vmem>>, %arg5: memref<32x128xf32, #tpu.memory_space<vmem>>, %arg6: memref<1x128xf32, #tpu.memory_space<vmem>>, %arg7: memref<2x128xf32, #tpu.memory_space<vmem>>) attributes {dimension_semantics = [#tpu.dimension_semantics<parallel>], iteration_bounds = array<i64: 1>, scalar_prefetch = 0 : i64, scratch_operands = 0 : i64, tpu.core_type = #tpu.core_type<tc>, window_params = [{transform_indices = @transform_0, window_bounds = array<i64: 1, 1>}, {transform_indices = @transform_1, window_bounds = array<i64: 2, 16>}, {pipeline_mode = #tpu.pipeline_mode<synchronous>, transform_indices = @transform_2, window_bounds = array<i64: 16, 160>}, {pipeline_mode = #tpu.pipeline_mode<synchronous>, transform_indices = @transform_3, window_bounds = array<i64: 1, 32>}, {pipeline_mode = #tpu.pipeline_mode<synchronous>, transform_indices = @transform_4, window_bounds = array<i64: 32, 128>}, {pipeline_mode = #tpu.pipeline_mode<synchronous>, transform_indices = @transform_5, window_bounds = array<i64: 1, 128>}, {transform_indices = @transform_6, window_bounds = array<i64: 2, 128>}]} {
    %c0 = arith.constant 0 : index
    %c0_0 = arith.constant 0 : index
    %0 = memref.load %arg1[%c0, %c0_0] : memref<1x1xf32, #tpu.memory_space<smem>>
    %c0_1 = arith.constant 0 : index
    %c0_2 = arith.constant 0 : index
    %1 = vector.load %arg2[%c0_1, %c0_2] : memref<2x16xf32, #tpu.memory_space<vmem>>, vector<2x16xf32>
    %c0_3 = arith.constant 0 : index
    %c0_4 = arith.constant 0 : index
    %2 = vector.load %arg3[%c0_3, %c0_4] : memref<16x160xf32, #tpu.memory_space<vmem>>, vector<16x160xf32>
    %cst = arith.constant dense<0.000000e+00> : vector<2x160xf32>
    %3 = tpu.matmul %1, %2, %cst {dimension_numbers = #tpu.dot_dimension_numbers<[1], [0], [0], [1], [0, 0, 1, 1], [], []>} : vector<2x16xf32>, vector<16x160xf32>, vector<2x160xf32> -> vector<2x160xf32>
    %4 = vector.extract_strided_slice %3 {offsets = [0, 0], sizes = [2, 128], strides = [1, 1]} : vector<2x160xf32> to vector<2x128xf32>
    %5 = vector.extract_strided_slice %3 {offsets = [0, 128], sizes = [2, 32], strides = [1, 1]} : vector<2x160xf32> to vector<2x32xf32>
    %c0_5 = arith.constant 0 : index
    %c0_6 = arith.constant 0 : index
    %6 = vector.load %arg4[%c0_5, %c0_6] : memref<1x32xf32, #tpu.memory_space<vmem>>, vector<1x32xf32>
    %7 = vector.broadcast %6 : vector<1x32xf32> to vector<2x32xf32>
    %8 = arith.addf %5, %7 : vector<2x32xf32>
    %9 = math.tanh %8 : vector<2x32xf32>
    %c0_7 = arith.constant 0 : index
    %c0_8 = arith.constant 0 : index
    %10 = vector.load %arg5[%c0_7, %c0_8] : memref<32x128xf32, #tpu.memory_space<vmem>>, vector<32x128xf32>
    %cst_9 = arith.constant dense<0.000000e+00> : vector<2x128xf32>
    %11 = tpu.matmul %9, %10, %cst_9 {dimension_numbers = #tpu.dot_dimension_numbers<[1], [0], [0], [1], [0, 0, 1, 1], [], []>} : vector<2x32xf32>, vector<32x128xf32>, vector<2x128xf32> -> vector<2x128xf32>
    %c0_10 = arith.constant 0 : index
    %c0_11 = arith.constant 0 : index
    %12 = vector.load %arg6[%c0_10, %c0_11] : memref<1x128xf32, #tpu.memory_space<vmem>>, vector<1x128xf32>
    %13 = vector.broadcast %12 : vector<1x128xf32> to vector<2x128xf32>
    %14 = arith.addf %11, %13 : vector<2x128xf32>
    %15 = arith.subf %4, %14 : vector<2x128xf32>
    %16 = vector.broadcast %0 : f32 to vector<2x128xf32>
    %17 = arith.mulf %16, %15 : vector<2x128xf32>
    %18 = arith.addf %14, %17 : vector<2x128xf32>
    %c0_12 = arith.constant 0 : index
    %c0_13 = arith.constant 0 : index
    %19 = vector.load %arg7[%c0_12, %c0_13] : memref<2x128xf32, #tpu.memory_space<vmem>>, vector<2x128xf32>
    tpu.vector_store %arg7[%c0_12, %c0_13], %18 {strides = array<i32>} : memref<2x128xf32, #tpu.memory_space<vmem>>, vector<2x128xf32>,
    return
  }
  func.func @transform_0(%arg0: i32) -> (i32, i32) {
    %c0_i32 = arith.constant 0 : i32
    %c0_i32_0 = arith.constant 0 : i32
    %c0_i32_1 = arith.constant 0 : i32
    return %c0_i32, %c0_i32_0 : i32, i32
  }
  func.func @transform_1(%arg0: i32) -> (i32, i32) {
    %c0_i32 = arith.constant 0 : i32
    %c0_i32_0 = arith.constant 0 : i32
    return %arg0, %c0_i32 : i32, i32
  }
  func.func @transform_2(%arg0: i32) -> (i32, i32) {
    %c0_i32 = arith.constant 0 : i32
    %c0_i32_0 = arith.constant 0 : i32
    %c0_i32_1 = arith.constant 0 : i32
    return %c0_i32, %c0_i32_0 : i32, i32
  }
  func.func @transform_3(%arg0: i32) -> (i32, i32) {
    %c0_i32 = arith.constant 0 : i32
    %c0_i32_0 = arith.constant 0 : i32
    %c0_i32_1 = arith.constant 0 : i32
    return %c0_i32, %c0_i32_0 : i32, i32
  }
  func.func @transform_4(%arg0: i32) -> (i32, i32) {
    %c0_i32 = arith.constant 0 : i32
    %c0_i32_0 = arith.constant 0 : i32
    %c0_i32_1 = arith.constant 0 : i32
    return %c0_i32, %c0_i32_0 : i32, i32
  }
  func.func @transform_5(%arg0: i32) -> (i32, i32) {
    %c0_i32 = arith.constant 0 : i32
    %c0_i32_0 = arith.constant 0 : i32
    %c0_i32_1 = arith.constant 0 : i32
    return %c0_i32, %c0_i32_0 : i32, i32
  }
  func.func @transform_6(%arg0: i32) -> (i32, i32) {
    %c0_i32 = arith.constant 0 : i32
    %c0_i32_0 = arith.constant 0 : i32
    return %arg0, %c0_i32 : i32, i32
  }
}

</mosaic_0001>

<llo_original>
// kernel: tpu_custom_call.1
$region0: #{tpu_custom_call.1}
  #allocation0 [shape = 'u32[]', space=smem, size = 0x4, offset = 0x4, fixed_abs, tag = 'smem constant byte address 0x4 - core index']
  #allocation1 [shape = 'u32[144,128]{1,0:T(1,128)}', space=vmem, size = 0x12000, scoped, tag = 'internal scratch']
  #allocation2 [shape = 'f32[1,1]{1,0:T(1,128)S(6)}', space=smem, size = 0x200, scoped, tag = 'scoped memory for tpu_custom_call.1']
  %s0 = inlined_call_operand.<no memory space> [shape: f32[1,1], index: 0, kind: input, shape index: {}]
  %s1 = inlined_call_operand.vmem [shape: f32[2,16], index: 1, kind: input, shape index: {}]
  %s2 = inlined_call_operand.hbm [shape: f32[16,160], index: 2, kind: input, shape index: {}]
  %s3 = inlined_call_operand.vmem [shape: f32[1,32], index: 3, kind: input, shape index: {}]
  %s4 = inlined_call_operand.hbm [shape: f32[32,128], index: 4, kind: input, shape index: {}]
  %s5 = inlined_call_operand.vmem [shape: f32[1,128], index: 5, kind: input, shape index: {}]
  %s6 = inlined_call_operand.hbm [shape: f32[2,128], index: 6, kind: output, shape index: {}]
  %s7 = sld [smem:[#allocation0]]
  $region42: #{tpu_custom_call.1} parent=0
    _
  %s9 = ssub.s32 1, %s7
  %s10 = scalar_select 0, %s9, %s7
  %11 = sst [smem:[#allocation2]] %s0
  $region1: #{tpu_custom_call.1} parent=0
    #allocation3 [shape = 'u8[16384]{0}', space=vmem, size = 0x4000, scoped, tag = 'input window, operand 2, single buffered']
    #allocation4 [shape = 's32[1]{0}', space=sflag, size = 0x4, scoped, tag = 'scoped memory for tpu_custom_call.1']
    #allocation5 [shape = 's32[1]{0}', space=sflag, size = 0x4, scoped, tag = 'scoped memory for tpu_custom_call.1']
    #allocation6 [shape = 'u8[16384]{0}', space=vmem, size = 0x4000, scoped, tag = 'input window, operand 4, single buffered']
    #allocation7 [shape = 's32[1]{0}', space=sflag, size = 0x4, scoped, tag = 'scoped memory for tpu_custom_call.1']
    #allocation8 [shape = 'u8[1024]{0}', space=vmem, size = 0x400, scoped, tag = 'output window, operand 0, single buffered']
    %12 = vsyncpa [#allocation4], 0
    %13 = vsyncpa [#allocation7], 0
    %14 = vsyncpa [#allocation5], 0
    // Predicated region
    $region2: #{tpu_custom_call.1} parent=1 // pred_check
      _
    $region3: #{tpu_custom_call.1} parent=1 // pred_check_branch
      %16 = sbr.rel (0) target = $region5
    $region4: #{tpu_custom_call.1} parent=1 // pred_region
      _
    $region5: #{tpu_custom_call.1} parent=1 // pred_fallthru
      _
    // Predicated region
    $region6: #{tpu_custom_call.1} parent=1 // pred_check
      _
    $region7: #{tpu_custom_call.1} parent=1 // pred_check_branch
      %18 = sbr.rel (0) target = $region9
    $region8: #{tpu_custom_call.1} parent=1 // pred_region
      _
    $region9: #{tpu_custom_call.1} parent=1 // pred_fallthru
      _
    // Predicated region
    $region10: #{tpu_custom_call.1} parent=1 // pred_check
      _
    $region11: #{tpu_custom_call.1} parent=1 // pred_check_branch
      %20 = sbr.rel (0) target = $region13
    $region12: #{tpu_custom_call.1} parent=1 // pred_region
      %s22 = ssub.s32 512, 512
      %23 = vsyncadd [#allocation4], %s22
      %s24 = sshll.u32 [#allocation3], 4
      %s25 = int_to_ptr.vmem [resolvable:$true] %s24
      %30 = dma.hbm_to_vmem [thread:$0]  %s2, 512, %s25, [#allocation4], 256, 256, 16
    $region13: #{tpu_custom_call.1} parent=1 // pred_fallthru
      _
    // Predicated region
    $region14: #{tpu_custom_call.1} parent=1 // pred_check
      _
    $region15: #{tpu_custom_call.1} parent=1 // pred_check_branch
      %32 = sbr.rel (0) target = $region17
    $region16: #{tpu_custom_call.1} parent=1 // pred_region
      _
    $region17: #{tpu_custom_call.1} parent=1 // pred_fallthru
      _
    // Predicated region
    $region18: #{tpu_custom_call.1} parent=1 // pred_check
      _
    $region19: #{tpu_custom_call.1} parent=1 // pred_check_branch
      %34 = sbr.rel (0) target = $region21
    $region20: #{tpu_custom_call.1} parent=1 // pred_region
      %s36 = ssub.s32 512, 512
      %37 = vsyncadd [#allocation7], %s36
      %s38 = sshll.u32 [#allocation6], 4
      %s39 = int_to_ptr.vmem [resolvable:$true] %s38
      %44 = dma.hbm_to_vmem [thread:$0]  %s4, 512, %s39, [#allocation7], 128, 128, 8
    $region21: #{tpu_custom_call.1} parent=1 // pred_fallthru
      _
    // Predicated region
    $region22: #{tpu_custom_call.1} parent=1 // pred_check
      _
    $region23: #{tpu_custom_call.1} parent=1 // pred_check_branch
      %46 = sbr.rel (0) target = $region25
    $region24: #{tpu_custom_call.1} parent=1 // pred_region
      _
    $region25: #{tpu_custom_call.1} parent=1 // pred_fallthru
      _
    // Predicated region
    $region26: #{tpu_custom_call.1} parent=1 // pred_check
      _
    $region27: #{tpu_custom_call.1} parent=1 // pred_check_branch
      %48 = sbr.rel (0) target = $region29
    $region28: #{tpu_custom_call.1} parent=1 // pred_region
      %49 = dma.done [#allocation4], 512
    $region29: #{tpu_custom_call.1} parent=1 // pred_fallthru
      _
    // Predicated region
    $region30: #{tpu_custom_call.1} parent=1 // pred_check
      _
    $region31: #{tpu_custom_call.1} parent=1 // pred_check_branch
      %51 = sbr.rel (0) target = $region33
    $region32: #{tpu_custom_call.1} parent=1 // pred_region
      %52 = dma.done [#allocation7], 512
    $region33: #{tpu_custom_call.1} parent=1 // pred_fallthru
      _
    %s53 = sld [smem:[#allocation2]]
    %v54 = vld [vmem:[%s1] sm:$0x3]
    %v55 = vld [vmem:[#allocation3] sm:$0xff]
    %v56 = vld [vmem:[#allocation3 + $0x8] sm:$0xff]
    %v57 = vld [vmem:[#allocation3 + $0x10] sm:$0xff]
    %v58 = vld [vmem:[#allocation3 + $0x18] sm:$0xff]
    %vm59 = vcmask 130048
    %v61 = vsel %vm59, %v54, 0
    %63 = vmatprep.subr.mxu0 %v56
    %64 = vmatpush1.msra.mxu0 %v55
    %65 = vmatprep.subr.mxu0 %v58
    %66 = vmatpush1.msra.mxu0 %v57
    %67 = vmatprep.subr.mxu0 0.0
    %68 = vmatpush1.msra.mxu0 0.0
    %69 = vmatprep.subr.mxu0 0.0
    %70 = vmatpush1.msra.mxu0 0.0
    %71 = vmatprep.subr.mxu0 0.0
    %72 = vmatpush1.msra.mxu0 0.0
    %73 = vmatprep.subr.mxu0 0.0
    %74 = vmatpush1.msra.mxu0 0.0
    %75 = vmatprep.subr.mxu0 0.0
    %76 = vmatpush1.msra.mxu0 0.0
    %77 = vmatprep.subr.mxu0 0.0
    %78 = vmatpush1.msra.mxu0 0.0
    %79 = vmatprep.subr.mxu0 0.0
    %80 = vmatpush1.msra.mxu0 0.0
    %81 = vmatprep.subr.mxu0 0.0
    %82 = vmatpush1.msra.mxu0 0.0
    %83 = vmatprep.subr.mxu0 0.0
    %84 = vmatpush1.msra.mxu0 0.0
    %85 = vmatprep.subr.mxu0 0.0
    %86 = vmatpush1.msra.mxu0 0.0
    %87 = vmatprep.subr.mxu0 0.0
    %88 = vmatpush1.msra.mxu0 0.0
    %89 = vmatprep.subr.mxu0 0.0
    %90 = vmatpush1.msra.mxu0 0.0
    %91 = vmatprep.subr.mxu0 0.0
    %92 = vmatpush1.msra.mxu0 0.0
    %93 = vmatprep.subr.mxu0 0.0
    %94 = vmatpush1.msra.mxu0 0.0
    %95 = vmatprep.subr.mxu0 0.0
    %96 = vmatpush1.msra.mxu0 0.0
    %97 = vmatprep.subr.mxu0 0.0
    %98 = vmatpush1.msra.mxu0 0.0
    %99 = vmatprep.subr.mxu0 0.0
    %100 = vmatpush1.msra.mxu0 0.0
    %101 = vmatprep.subr.mxu0 0.0
    %102 = vmatpush1.msra.mxu0 0.0
    %103 = vmatprep.subr.mxu0 0.0
    %104 = vmatpush1.msra.mxu0 0.0
    %105 = vmatprep.subr.mxu0 0.0
    %106 = vmatpush1.msra.mxu0 0.0
    %107 = vmatprep.subr.mxu0 0.0
    %108 = vmatpush1.msra.mxu0 0.0
    %109 = vmatprep.subr.mxu0 0.0
    %110 = vmatpush1.msra.mxu0 0.0
    %111 = vmatprep.subr.mxu0 0.0
    %112 = vmatpush1.msra.mxu0 0.0
    %113 = vmatprep.subr.mxu0 0.0
    %114 = vmatpush1.msra.mxu0 0.0
    %115 = vmatprep.subr.mxu0 0.0
    %116 = vmatpush1.msra.mxu0 0.0
    %117 = vmatprep.subr.mxu0 0.0
    %118 = vmatpush1.msra.mxu0 0.0
    %119 = vmatprep.subr.mxu0 0.0
    %120 = vmatpush1.msra.mxu0 0.0
    %121 = vmatprep.subr.mxu0 0.0
    %122 = vmatpush1.msra.mxu0 0.0
    %123 = vmatprep.subr.mxu0 0.0
    %124 = vmatpush1.msra.mxu0 0.0
    %125 = vmatprep.subr.mxu0 0.0
    %126 = vmatpush1.msra.mxu0 0.0
    %127 = vmatprep.mubr.f32.mxu0 0.0
    %128 = vmatmul.mubr.f32.gmra.mrb[0].mxu0 %v61
    %v129 = vpop.f32.mrb[0].mxu0
    %v130 = vadd.f32 0.0, %v129
    %v131 = vpop.f32.mrb[0].mxu0
    %v132 = vadd.f32 0.0, %v131
    %133 = vdwg.mxu0
    %v134 = vld [vmem:[%s3] sm:$0x1]
    %v136 = vlaneseq
    %v137 = vshrl.u32 %v136, 7
    %v138 = vsub.s32 0, %v137
    %v139 = vrot.slane %v134, %v138
    %v141 = vadd.f32 %v132, %v139
    %v142 = vtanh.pop %v141
    %v143 = vld [vmem:[#allocation6] sm:$0xff]
    %v144 = vld [vmem:[#allocation6 + $0x8] sm:$0xff]
    %v145 = vld [vmem:[#allocation6 + $0x10] sm:$0xff]
    %v146 = vld [vmem:[#allocation6 + $0x18] sm:$0xff]
    %v147 = vld [vmem:[%s5] sm:$0x1]
    %v149 = vlaneseq
    %v150 = vshrl.u32 %v149, 7
    %v151 = vsub.s32 0, %v150
    %v152 = vrot.slane %v147, %v151
    %vm154 = vcmask 261120
    %v156 = vsel %vm154, %v142, 0
    %158 = vmatprep.subr.mxu0 0.0
    %159 = vmatpush1.msra.mxu0 %v143
    %160 = vmatprep.subr.mxu0 0.0
    %161 = vmatpush1.msra.mxu0 %v144
    %162 = vmatprep.subr.mxu0 0.0
    %163 = vmatpush1.msra.mxu0 %v145
    %164 = vmatprep.subr.mxu0 0.0
    %165 = vmatpush1.msra.mxu0 %v146
    %166 = vmatprep.subr.mxu0 0.0
    %167 = vmatpush1.msra.mxu0 0.0
    %168 = vmatprep.subr.mxu0 0.0
    %169 = vmatpush1.msra.mxu0 0.0
    %170 = vmatprep.subr.mxu0 0.0
    %171 = vmatpush1.msra.mxu0 0.0
    %172 = vmatprep.subr.mxu0 0.0
    %173 = vmatpush1.msra.mxu0 0.0
    %174 = vmatprep.subr.mxu0 0.0
    %175 = vmatpush1.msra.mxu0 0.0
    %176 = vmatprep.subr.mxu0 0.0
    %177 = vmatpush1.msra.mxu0 0.0
    %178 = vmatprep.subr.mxu0 0.0
    %179 = vmatpush1.msra.mxu0 0.0
    %180 = vmatprep.subr.mxu0 0.0
    %181 = vmatpush1.msra.mxu0 0.0
    %182 = vmatprep.subr.mxu0 0.0
    %183 = vmatpush1.msra.mxu0 0.0
    %184 = vmatprep.subr.mxu0 0.0
    %185 = vmatpush1.msra.mxu0 0.0
    %186 = vmatprep.subr.mxu0 0.0
    %187 = vmatpush1.msra.mxu0 0.0
    %188 = vmatprep.subr.mxu0 0.0
    %189 = vmatpush1.msra.mxu0 0.0
    %190 = vmatprep.subr.mxu0 0.0
    %191 = vmatpush1.msra.mxu0 0.0
    %192 = vmatprep.subr.mxu0 0.0
    %193 = vmatpush1.msra.mxu0 0.0
    %194 = vmatprep.subr.mxu0 0.0
    %195 = vmatpush1.msra.mxu0 0.0
    %196 = vmatprep.subr.mxu0 0.0
    %197 = vmatpush1.msra.mxu0 0.0
    %198 = vmatprep.subr.mxu0 0.0
    %199 = vmatpush1.msra.mxu0 0.0
    %200 = vmatprep.subr.mxu0 0.0
    %201 = vmatpush1.msra.mxu0 0.0
    %202 = vmatprep.subr.mxu0 0.0
    %203 = vmatpush1.msra.mxu0 0.0
    %204 = vmatprep.subr.mxu0 0.0
    %205 = vmatpush1.msra.mxu0 0.0
    %206 = vmatprep.subr.mxu0 0.0
    %207 = vmatpush1.msra.mxu0 0.0
    %208 = vmatprep.subr.mxu0 0.0
    %209 = vmatpush1.msra.mxu0 0.0
    %210 = vmatprep.subr.mxu0 0.0
    %211 = vmatpush1.msra.mxu0 0.0
    %212 = vmatprep.subr.mxu0 0.0
    %213 = vmatpush1.msra.mxu0 0.0
    %214 = vmatprep.subr.mxu0 0.0
    %215 = vmatpush1.msra.mxu0 0.0
    %216 = vmatprep.subr.mxu0 0.0
    %217 = vmatpush1.msra.mxu0 0.0
    %218 = vmatprep.subr.mxu0 0.0
    %219 = vmatpush1.msra.mxu0 0.0
    %220 = vmatprep.subr.mxu0 0.0
    %221 = vmatpush1.msra.mxu0 0.0
    %222 = vmatprep.mubr.f32.mxu0 0.0
    %223 = vmatmul.mubr.f32.gmra.mrb[0].mxu0 %v156
    %v224 = vpop.f32.mrb[0].mxu0
    %v225 = vadd.f32 %v152, %v224
    %v226 = vpop.f32.mrb[0].mxu0
    %227 = vdwg.mxu0
    %v228 = vsub.f32 %v130, %v225
    %v229 = vstv %s53
    %v230 = vmul.f32 %v229, %v228
    %v231 = vadd.f32 %v225, %v230
    %232 = vst [vmem:[#allocation8] sm:$0x3] %v231
    // Predicated region
    $region34: #{tpu_custom_call.1} parent=1 // pred_check
      _
    $region35: #{tpu_custom_call.1} parent=1 // pred_check_branch
      %234 = sbr.rel (0) target = $region37
    $region36: #{tpu_custom_call.1} parent=1 // pred_region
      %s236 = ssub.s32 32, 32
      %237 = vsyncadd [#allocation5], %s236
      %s239 = sshll.u32 [#allocation8], 4
      %s240 = int_to_ptr.vmem [resolvable:$true] %s239
      %242 = dma.vmem_to_hbm [thread:$0]  %s240, 32, %s6, [#allocation5]
    $region37: #{tpu_custom_call.1} parent=1 // pred_fallthru
      _
    // Predicated region
    $region38: #{tpu_custom_call.1} parent=1 // pred_check
      _
    $region39: #{tpu_custom_call.1} parent=1 // pred_check_branch
      %244 = sbr.rel (0) target = $region41
    $region40: #{tpu_custom_call.1} parent=1 // pred_region
      %245 = dma.done [#allocation5], 32
    $region41: #{tpu_custom_call.1} parent=1 // pred_fallthru
      _
    %246 = vsyncpa [#allocation4], 1
    %247 = vsyncpa [#allocation7], 1
    %248 = vsyncpa [#allocation5], 1

</llo_original>
